<compile_context>
chip_gen: v7x
topology: tpu7x:2x2x1
jax: 0.10.0
libtpu: 0.0.40
codegen_flags: <defaults>
</compile_context>

<pallas_src>
import math

import numpy as np
import jax
import jax.numpy as jnp
from jax import lax
from jax.experimental import pallas as pl
from jax.experimental.pallas import tpu as pltpu


def _cdiv(a, b):
    return (a + b - 1) // b


def _round_up(a, b):
    return _cdiv(a, b) * b


def _build_gaussian_kernel_2d(kernel_size, sigma, dim=2):
    """Reproduces GaussianSmoothing.__init__ kernel construction (dim=2),
    keeping the original (x - mean) / (2 * std) quirk."""
    if isinstance(kernel_size, (int, float)):
        kernel_size = [int(kernel_size)] * dim
    if isinstance(sigma, (int, float)):
        sigma = [float(sigma)] * dim
    kernel = np.array(1.0, dtype=np.float64)
    grids = np.meshgrid(
        *[np.arange(s, dtype=np.float64) for s in kernel_size], indexing="ij"
    )
    for size, std, mgrid in zip(kernel_size, sigma, grids):
        mean = (size - 1) / 2.0
        kernel = kernel * (
            1.0 / (std * math.sqrt(2 * math.pi))
            * np.exp(-(((mgrid - mean) / (2 * std)) ** 2))
        )
    kernel = kernel / np.sum(kernel)
    return kernel  # (kH, kW), float64, sums to 1


def make_gaussian_smoothing(channels, kernel_size, sigma, dim=2, _tile_override=None):
    """Returns (forward_fn, weight_OIHW) mirroring the torch module (dim=2).

    `_tile_override=(TH, CB)` is a test/debug knob forcing the row-tile and
    channel-block sizes (used to exercise the halo-tiled path at small shapes).
    """
    assert dim == 2, "This Pallas implementation covers the default dim=2 case."
    k2d = _build_gaussian_kernel_2d(kernel_size, sigma, dim)
    kH, kW = k2d.shape
    # Separable factors (each sums to 1; outer(w_h, w_w) == normalized k2d).
    w_h = [float(v) for v in k2d.sum(axis=1)]
    w_w = [float(v) for v in k2d.sum(axis=0)]

    def smooth_kernel(x_ref, o_ref):
        # x_ref: (TH + kH - 1, W, CB)  input dtype, channels on the lane axis
        # o_ref: (TH, Wo, CB)
        TH, Wo, _ = o_ref.shape
        # Vertical pass first (kH taps): shifts along the cheap outer (row)
        # axis; cast each tap slice (not the whole block) to f32.
        acc = w_h[0] * x_ref[pl.ds(0, TH), :, :].astype(jnp.float32)
        for i in range(1, kH):
            acc = acc + w_h[i] * x_ref[pl.ds(i, TH), :, :].astype(jnp.float32)
        # Horizontal pass second (kW taps): sublane shifts on the already
        # row-reduced (TH, W, CB) value -> fewer expensive sublane taps.
        out = w_w[0] * acc[:, 0:Wo, :]
        for j in range(1, kW):
            out = out + w_w[j] * acc[:, j:j + Wo, :]
        # TODO(synk): on v6e/v7x with bf16 inputs keep the horizontal taps in
        # bf16 (packed vregs) and only accumulate vertically in f32 (not v5e).
        o_ref[...] = out.astype(o_ref.dtype)

    def _smooth_channels_last(xt):
        """xt: (H, W, NC) channels-last; returns (Ho, Wo, NC)."""
        H, W, NC = xt.shape
        assert H >= kH and W >= kW
        Ho, Wo = H - kH + 1, W - kW + 1
        dtype = xt.dtype
        isz = jnp.dtype(dtype).itemsize

        # ---- VMEM-aware tile selection -------------------------------------
        try:
            vmem_cap = int(pltpu.get_tpu_info().vmem_capacity_bytes)
        except Exception:
            vmem_cap = 64 * 1024 * 1024          # conservative: v7x per-core VMEM
        budget = int(0.30 * vmem_cap)            # target per-block footprint
        vmem_limit = min(int(0.75 * vmem_cap), vmem_cap - (4 << 20))

        def footprint(th, cb):
            hin = th + kH - 1
            # double-buffered in/out blocks + live f32 values
            # (tap slice + vertical acc + horizontal acc + one tap temp).
            return cb * (2 * hin * W * isz + 2 * th * Wo * isz
                         + 4 * (hin * W + th * W + 2 * th * Wo))

        if _tile_override is not None:
            TH = max(1, min(int(_tile_override[0]), Ho))
            CB = max(128, (int(_tile_override[1]) // 128) * 128)
        else:
            # 1) rows per tile at the minimum (128-lane) channel block
            per_row = 2 * W * isz + 2 * Wo * isz + 4 * (2 * W + 2 * Wo)
            halo = (kH - 1) * W * (2 * isz + 4)
            th_cap = max(1, (budget // 128 - halo) // per_row)
            if th_cap >= Ho:
                TH = Ho
            else:
                TH = max(8, (th_cap // 8) * 8) if th_cap >= 8 else int(th_cap)
            # 2) grow the channel block under the same budget, then rebalance
            #    so the blocks divide the padded channel count evenly.
            CB = max(128, ((budget // footprint(TH, 1)) // 128) * 128)
            num_c = _cdiv(NC, CB)
            CB = _round_up(_cdiv(NC, num_c), 128)
            # 3) keep >=2 grid steps when there is enough work (v7x: 2 TCs).
            if _cdiv(Ho, TH) * _cdiv(NC, CB) == 1:
                if NC > 128:
                    CB = _round_up(_cdiv(NC, 2), 128)
                elif Ho >= 16:
                    TH = _cdiv(Ho, 2)

        num_h = _cdiv(Ho, TH)
        num_c = _cdiv(NC, CB)
        nc_pad = num_c * CB
        Ho_pad = num_h * TH
        H_pad = Ho_pad + kH - 1
        Hin = TH + kH - 1

        pad_h, pad_c = H_pad - H, nc_pad - NC
        if pad_h or pad_c:
            xt = jnp.pad(xt, ((0, pad_h), (0, 0), (0, pad_c)))

        if num_h == 1:
            in_spec = pl.BlockSpec((Hin, W, CB), lambda c, h: (0, 0, c))
        else:
            # (kH-1)-row halo: the input H dim is element-indexed so that
            # consecutive row tiles overlap by kH-1 rows.
            in_spec = pl.BlockSpec((pl.Element(Hin), W, CB),
                                   lambda c, h: (h * TH, 0, c))

        out_t = pl.pallas_call(
            smooth_kernel,
            out_shape=jax.ShapeDtypeStruct((Ho_pad, Wo, nc_pad), dtype),
            grid=(num_c, num_h),
            in_specs=[in_spec],
            out_specs=pl.BlockSpec((TH, Wo, CB), lambda c, h: (h, 0, c)),
            compiler_params=pltpu.CompilerParams(
                dimension_semantics=("parallel", "parallel"),
                vmem_limit_bytes=int(vmem_limit),
            ),
        )(xt)
        return out_t[:Ho, :, :NC]

    def forward(x):
        # NCHW in / NCHW out, matching the torch module.
        # TODO(synk): the two transposes below each cost a full HBM pass; if
        # the surrounding pipeline can supply channels-last (H, W, N*C) data,
        # call `forward.channels_last` directly and skip them.
        N, C, H, W = x.shape
        assert C == channels
        NC = N * C
        xt = jnp.transpose(x.reshape(NC, H, W), (1, 2, 0))
        out_t = _smooth_channels_last(xt)
        Ho, Wo = out_t.shape[0], out_t.shape[1]
        return jnp.transpose(out_t, (2, 0, 1)).reshape(N, C, Ho, Wo)

    forward.channels_last = _smooth_channels_last

    k2d_f32 = k2d.astype(np.float32)
    weight_oihw = jnp.asarray(np.tile(k2d_f32[None, None], (channels, 1, 1, 1)))
    return forward, weight_oihw


if __name__ == "__main__":
    kernel_size, sigma = 5, 1.0

    # --- Case 1: small NCHW input (single H tile, plain blocked path) -------
    N, C, H, W = 2, 4, 16, 16
    x = jax.random.normal(jax.random.PRNGKey(0), (N, C, H, W), dtype=jnp.float32)
    smooth, weight = make_gaussian_smoothing(C, kernel_size, sigma, dim=2)
    out = jax.block_until_ready(smooth(x))
    ref = lax.conv_general_dilated(
        x, weight, window_strides=(1, 1), padding="VALID",
        dimension_numbers=("NCHW", "OIHW", "NCHW"), feature_group_count=C,
        precision=lax.Precision.HIGHEST)
    assert out.shape == (N, C, H - kernel_size + 1, W - kernel_size + 1)
    np.testing.assert_allclose(np.asarray(out), np.asarray(ref),
                               rtol=1e-5, atol=1e-5)

    # --- Case 2: taller image with forced small row tiles, exercising the ---
    # --- (kH-1)-halo H-tiling path (pl.Element input BlockSpec). ------------
    N2, C2, H2, W2 = 1, 3, 40, 16
    x2 = jax.random.normal(jax.random.PRNGKey(0), (N2, C2, H2, W2),
                           dtype=jnp.float32)
    smooth2, weight2 = make_gaussian_smoothing(
        C2, kernel_size, sigma, dim=2, _tile_override=(16, 128))
    out2 = jax.block_until_ready(smooth2(x2))
    ref2 = lax.conv_general_dilated(
        x2, weight2, window_strides=(1, 1), padding="VALID",
        dimension_numbers=("NCHW", "OIHW", "NCHW"), feature_group_count=C2,
        precision=lax.Precision.HIGHEST)
    assert out2.shape == (N2, C2, H2 - kernel_size + 1, W2 - kernel_size + 1)
    np.testing.assert_allclose(np.asarray(out2), np.asarray(ref2),
                               rtol=1e-5, atol=1e-5)

    print("KERNEL_OK")
</pallas_src>

<mosaic_0001>
module attributes {stable_mosaic.version = 11 : i64} {
  func.func @smooth_kernel(%arg0: i32, %arg1: i32, %arg2: memref<16x16x128xf32, #tpu.memory_space<vmem>>, %arg3: memref<12x12x128xf32, #tpu.memory_space<vmem>>) attributes {dimension_semantics = [#tpu.dimension_semantics<parallel>, #tpu.dimension_semantics<parallel>], iteration_bounds = array<i64: 1, 1>, scalar_prefetch = 0 : i64, scratch_operands = 0 : i64, tpu.core_type = #tpu.core_type<tc>, window_params = [{transform_indices = @transform_0, window_bounds = array<i64: 16, 16, 128>}, {transform_indices = @transform_1, window_bounds = array<i64: 12, 12, 128>}]} {
    %c0 = arith.constant 0 : index
    %c0_0 = arith.constant 0 : index
    %c0_1 = arith.constant 0 : index
    %0 = vector.load %arg2[%c0, %c0_0, %c0_1] : memref<16x16x128xf32, #tpu.memory_space<vmem>>, vector<12x16x128xf32>
    %cst = arith.constant 0.111703366 : f32
    %1 = vector.broadcast %cst : f32 to vector<12x16x128xf32>
    %2 = arith.mulf %1, %0 : vector<12x16x128xf32>
    %c1 = arith.constant 1 : index
    %c0_2 = arith.constant 0 : index
    %c0_3 = arith.constant 0 : index
    %3 = vector.load %arg2[%c1, %c0_2, %c0_3] : memref<16x16x128xf32, #tpu.memory_space<vmem>>, vector<12x16x128xf32>
    %cst_4 = arith.constant 0.236476019 : f32
    %4 = vector.broadcast %cst_4 : f32 to vector<12x16x128xf32>
    %5 = arith.mulf %4, %3 : vector<12x16x128xf32>
    %6 = arith.addf %2, %5 : vector<12x16x128xf32>
    %c2 = arith.constant 2 : index
    %c0_5 = arith.constant 0 : index
    %c0_6 = arith.constant 0 : index
    %7 = vector.load %arg2[%c2, %c0_5, %c0_6] : memref<16x16x128xf32, #tpu.memory_space<vmem>>, vector<12x16x128xf32>
    %cst_7 = arith.constant 0.30364123 : f32
    %8 = vector.broadcast %cst_7 : f32 to vector<12x16x128xf32>
    %9 = arith.mulf %8, %7 : vector<12x16x128xf32>
    %10 = arith.addf %6, %9 : vector<12x16x128xf32>
    %c3 = arith.constant 3 : index
    %c0_8 = arith.constant 0 : index
    %c0_9 = arith.constant 0 : index
    %11 = vector.load %arg2[%c3, %c0_8, %c0_9] : memref<16x16x128xf32, #tpu.memory_space<vmem>>, vector<12x16x128xf32>
    %cst_10 = arith.constant 0.236476019 : f32
    %12 = vector.broadcast %cst_10 : f32 to vector<12x16x128xf32>
    %13 = arith.mulf %12, %11 : vector<12x16x128xf32>
    %14 = arith.addf %10, %13 : vector<12x16x128xf32>
    %c4 = arith.constant 4 : index
    %c0_11 = arith.constant 0 : index
    %c0_12 = arith.constant 0 : index
    %15 = vector.load %arg2[%c4, %c0_11, %c0_12] : memref<16x16x128xf32, #tpu.memory_space<vmem>>, vector<12x16x128xf32>
    %cst_13 = arith.constant 0.111703366 : f32
    %16 = vector.broadcast %cst_13 : f32 to vector<12x16x128xf32>
    %17 = arith.mulf %16, %15 : vector<12x16x128xf32>
    %18 = arith.addf %14, %17 : vector<12x16x128xf32>
    %19 = vector.extract_strided_slice %18 {offsets = [0, 0, 0], sizes = [12, 12, 128], strides = [1, 1, 1]} : vector<12x16x128xf32> to vector<12x12x128xf32>
    %cst_14 = arith.constant 0.111703366 : f32
    %20 = vector.broadcast %cst_14 : f32 to vector<12x12x128xf32>
    %21 = arith.mulf %20, %19 : vector<12x12x128xf32>
    %22 = vector.extract_strided_slice %18 {offsets = [0, 1, 0], sizes = [12, 12, 128], strides = [1, 1, 1]} : vector<12x16x128xf32> to vector<12x12x128xf32>
    %cst_15 = arith.constant 0.236476019 : f32
    %23 = vector.broadcast %cst_15 : f32 to vector<12x12x128xf32>
    %24 = arith.mulf %23, %22 : vector<12x12x128xf32>
    %25 = arith.addf %21, %24 : vector<12x12x128xf32>
    %26 = vector.extract_strided_slice %18 {offsets = [0, 2, 0], sizes = [12, 12, 128], strides = [1, 1, 1]} : vector<12x16x128xf32> to vector<12x12x128xf32>
    %cst_16 = arith.constant 0.30364123 : f32
    %27 = vector.broadcast %cst_16 : f32 to vector<12x12x128xf32>
    %28 = arith.mulf %27, %26 : vector<12x12x128xf32>
    %29 = arith.addf %25, %28 : vector<12x12x128xf32>
    %30 = vector.extract_strided_slice %18 {offsets = [0, 3, 0], sizes = [12, 12, 128], strides = [1, 1, 1]} : vector<12x16x128xf32> to vector<12x12x128xf32>
    %cst_17 = arith.constant 0.236476019 : f32
    %31 = vector.broadcast %cst_17 : f32 to vector<12x12x128xf32>
    %32 = arith.mulf %31, %30 : vector<12x12x128xf32>
    %33 = arith.addf %29, %32 : vector<12x12x128xf32>
    %34 = vector.extract_strided_slice %18 {offsets = [0, 4, 0], sizes = [12, 12, 128], strides = [1, 1, 1]} : vector<12x16x128xf32> to vector<12x12x128xf32>
    %cst_18 = arith.constant 0.111703366 : f32
    %35 = vector.broadcast %cst_18 : f32 to vector<12x12x128xf32>
    %36 = arith.mulf %35, %34 : vector<12x12x128xf32>
    %37 = arith.addf %33, %36 : vector<12x12x128xf32>
    %c0_19 = arith.constant 0 : index
    %c0_20 = arith.constant 0 : index
    %c0_21 = arith.constant 0 : index
    %38 = vector.load %arg3[%c0_19, %c0_20, %c0_21] : memref<12x12x128xf32, #tpu.memory_space<vmem>>, vector<12x12x128xf32>
    tpu.vector_store %arg3[%c0_19, %c0_20, %c0_21], %37 {strides = array<i32>} : memref<12x12x128xf32, #tpu.memory_space<vmem>>, vector<12x12x128xf32>,
    return
  }
  func.func @transform_0(%arg0: i32, %arg1: i32) -> (i32, i32, i32) {
    %c0_i32 = arith.constant 0 : i32
    %c0_i32_0 = arith.constant 0 : i32
    %c0_i32_1 = arith.constant 0 : i32
    return %c0_i32, %c0_i32_0, %arg0 : i32, i32, i32
  }
  func.func @transform_1(%arg0: i32, %arg1: i32) -> (i32, i32, i32) {
    %c0_i32 = arith.constant 0 : i32
    %c0_i32_0 = arith.constant 0 : i32
    return %arg1, %c0_i32, %arg0 : i32, i32, i32
  }
}

</mosaic_0001>

<llo_original>
// kernel: tpu_custom_call.1
$region0: #{tpu_custom_call.1}
  #allocation0 [shape = 'u32[]', space=smem, size = 0x4, offset = 0x4, fixed_abs, tag = 'smem constant byte address 0x4 - core index']
  #allocation1 [shape = 'u32[144,128]{1,0:T(1,128)}', space=vmem, size = 0x12000, scoped, tag = 'internal scratch']
  %s0 = inlined_call_operand.hbm [shape: f32[16,16,128], index: 0, kind: input, shape index: {}]
  %s1 = inlined_call_operand.hbm [shape: f32[12,12,128], index: 1, kind: output, shape index: {}]
  %s2 = sld [smem:[#allocation0]]
  $region18: #{tpu_custom_call.1} parent=0
    _
  %s4 = ssub.s32 1, %s2
  %s5 = scalar_select 0, %s4, %s2
  $region1: #{tpu_custom_call.1} parent=0
    #allocation2 [shape = 'u8[131072]{0}', space=vmem, size = 0x20000, scoped, tag = 'input window, operand 0, single buffered']
    #allocation3 [shape = 's32[1]{0}', space=sflag, size = 0x4, scoped, tag = 'scoped memory for tpu_custom_call.1']
    #allocation4 [shape = 's32[1]{0}', space=sflag, size = 0x4, scoped, tag = 'scoped memory for tpu_custom_call.1']
    #allocation5 [shape = 'u8[98304]{0}', space=vmem, size = 0x18000, scoped, tag = 'output window, operand 0, single buffered']
    %6 = vsyncpa [#allocation3], 0
    %7 = vsyncpa [#allocation4], 0
    // Predicated region
    $region2: #{tpu_custom_call.1} parent=1 // pred_check
      _
    $region3: #{tpu_custom_call.1} parent=1 // pred_check_branch
      %9 = sbr.rel (0) target = $region5
    $region4: #{tpu_custom_call.1} parent=1 // pred_region
      %s11 = ssub.s32 4096, 4096
      %12 = vsyncadd [#allocation3], %s11
      %s13 = sshll.u32 [#allocation2], 4
      %s14 = int_to_ptr.vmem [resolvable:$true] %s13
      %19 = dma.hbm_to_vmem [thread:$0]  %s0, 4096, %s14, [#allocation3], 128, 128, 8
    $region5: #{tpu_custom_call.1} parent=1 // pred_fallthru
      _
    // Predicated region
    $region6: #{tpu_custom_call.1} parent=1 // pred_check
      _
    $region7: #{tpu_custom_call.1} parent=1 // pred_check_branch
      %21 = sbr.rel (0) target = $region9
    $region8: #{tpu_custom_call.1} parent=1 // pred_region
      %22 = dma.done [#allocation3], 4096
    $region9: #{tpu_custom_call.1} parent=1 // pred_fallthru
      _
    %v23 = vld [vmem:[#allocation2] sm:$0xff]
    %v24 = vld [vmem:[#allocation2 + $0x8] sm:$0xff]
    %v25 = vld [vmem:[#allocation2 + $0x10] sm:$0xff]
    %v26 = vld [vmem:[#allocation2 + $0x18] sm:$0xff]
    %v27 = vld [vmem:[#allocation2 + $0x20] sm:$0xff]
    %v28 = vld [vmem:[#allocation2 + $0x28] sm:$0xff]
    %v29 = vld [vmem:[#allocation2 + $0x30] sm:$0xff]
    %v30 = vld [vmem:[#allocation2 + $0x38] sm:$0xff]
    %v31 = vld [vmem:[#allocation2 + $0x40] sm:$0xff]
    %v32 = vld [vmem:[#allocation2 + $0x48] sm:$0xff]
    %v33 = vld [vmem:[#allocation2 + $0x50] sm:$0xff]
    %v34 = vld [vmem:[#allocation2 + $0x58] sm:$0xff]
    %v35 = vld [vmem:[#allocation2 + $0x60] sm:$0xff]
    %v36 = vld [vmem:[#allocation2 + $0x68] sm:$0xff]
    %v37 = vld [vmem:[#allocation2 + $0x70] sm:$0xff]
    %v38 = vld [vmem:[#allocation2 + $0x78] sm:$0xff]
    %v39 = vld [vmem:[#allocation2 + $0x80] sm:$0xff]
    %v40 = vld [vmem:[#allocation2 + $0x88] sm:$0xff]
    %v41 = vld [vmem:[#allocation2 + $0x90] sm:$0xff]
    %v42 = vld [vmem:[#allocation2 + $0x98] sm:$0xff]
    %v43 = vld [vmem:[#allocation2 + $0xa0] sm:$0xff]
    %v44 = vld [vmem:[#allocation2 + $0xa8] sm:$0xff]
    %v45 = vld [vmem:[#allocation2 + $0xb0] sm:$0xff]
    %v46 = vld [vmem:[#allocation2 + $0xb8] sm:$0xff]
    %v47 = vmul.f32 %v23, 0.111703366
    %v48 = vmul.f32 %v24, 0.111703366
    %v49 = vmul.f32 %v25, 0.111703366
    %v50 = vmul.f32 %v26, 0.111703366
    %v51 = vmul.f32 %v27, 0.111703366
    %v52 = vmul.f32 %v28, 0.111703366
    %v53 = vmul.f32 %v29, 0.111703366
    %v54 = vmul.f32 %v30, 0.111703366
    %v55 = vmul.f32 %v31, 0.111703366
    %v56 = vmul.f32 %v32, 0.111703366
    %v57 = vmul.f32 %v33, 0.111703366
    %v58 = vmul.f32 %v34, 0.111703366
    %v59 = vmul.f32 %v35, 0.111703366
    %v60 = vmul.f32 %v36, 0.111703366
    %v61 = vmul.f32 %v37, 0.111703366
    %v62 = vmul.f32 %v38, 0.111703366
    %v63 = vmul.f32 %v39, 0.111703366
    %v64 = vmul.f32 %v40, 0.111703366
    %v65 = vmul.f32 %v41, 0.111703366
    %v66 = vmul.f32 %v42, 0.111703366
    %v67 = vmul.f32 %v43, 0.111703366
    %v68 = vmul.f32 %v44, 0.111703366
    %v69 = vmul.f32 %v45, 0.111703366
    %v70 = vmul.f32 %v46, 0.111703366
    %s71 = scalar_lea.vmem [#allocation2], 16
    %v72 = vld [vmem:[%s71] sm:$0xff]
    %v73 = vld [vmem:[%s71 + $0x8] sm:$0xff]
    %v74 = vld [vmem:[%s71 + $0x10] sm:$0xff]
    %v75 = vld [vmem:[%s71 + $0x18] sm:$0xff]
    %v76 = vld [vmem:[%s71 + $0x20] sm:$0xff]
    %v77 = vld [vmem:[%s71 + $0x28] sm:$0xff]
    %v78 = vld [vmem:[%s71 + $0x30] sm:$0xff]
    %v79 = vld [vmem:[%s71 + $0x38] sm:$0xff]
    %v80 = vld [vmem:[%s71 + $0x40] sm:$0xff]
    %v81 = vld [vmem:[%s71 + $0x48] sm:$0xff]
    %v82 = vld [vmem:[%s71 + $0x50] sm:$0xff]
    %v83 = vld [vmem:[%s71 + $0x58] sm:$0xff]
    %v84 = vld [vmem:[%s71 + $0x60] sm:$0xff]
    %v85 = vld [vmem:[%s71 + $0x68] sm:$0xff]
    %v86 = vld [vmem:[%s71 + $0x70] sm:$0xff]
    %v87 = vld [vmem:[%s71 + $0x78] sm:$0xff]
    %v88 = vld [vmem:[%s71 + $0x80] sm:$0xff]
    %v89 = vld [vmem:[%s71 + $0x88] sm:$0xff]
    %v90 = vld [vmem:[%s71 + $0x90] sm:$0xff]
    %v91 = vld [vmem:[%s71 + $0x98] sm:$0xff]
    %v92 = vld [vmem:[%s71 + $0xa0] sm:$0xff]
    %v93 = vld [vmem:[%s71 + $0xa8] sm:$0xff]
    %v94 = vld [vmem:[%s71 + $0xb0] sm:$0xff]
    %v95 = vld [vmem:[%s71 + $0xb8] sm:$0xff]
    %v96 = vmul.f32 %v72, 0.23647602
    %v97 = vmul.f32 %v73, 0.23647602
    %v98 = vmul.f32 %v74, 0.23647602
    %v99 = vmul.f32 %v75, 0.23647602
    %v100 = vmul.f32 %v76, 0.23647602
    %v101 = vmul.f32 %v77, 0.23647602
    %v102 = vmul.f32 %v78, 0.23647602
    %v103 = vmul.f32 %v79, 0.23647602
    %v104 = vmul.f32 %v80, 0.23647602
    %v105 = vmul.f32 %v81, 0.23647602
    %v106 = vmul.f32 %v82, 0.23647602
    %v107 = vmul.f32 %v83, 0.23647602
    %v108 = vmul.f32 %v84, 0.23647602
    %v109 = vmul.f32 %v85, 0.23647602
    %v110 = vmul.f32 %v86, 0.23647602
    %v111 = vmul.f32 %v87, 0.23647602
    %v112 = vmul.f32 %v88, 0.23647602
    %v113 = vmul.f32 %v89, 0.23647602
    %v114 = vmul.f32 %v90, 0.23647602
    %v115 = vmul.f32 %v91, 0.23647602
    %v116 = vmul.f32 %v92, 0.23647602
    %v117 = vmul.f32 %v93, 0.23647602
    %v118 = vmul.f32 %v94, 0.23647602
    %v119 = vmul.f32 %v95, 0.23647602
    %v120 = vadd.f32 %v47, %v96
    %v121 = vadd.f32 %v48, %v97
    %v122 = vadd.f32 %v49, %v98
    %v123 = vadd.f32 %v50, %v99
    %v124 = vadd.f32 %v51, %v100
    %v125 = vadd.f32 %v52, %v101
    %v126 = vadd.f32 %v53, %v102
    %v127 = vadd.f32 %v54, %v103
    %v128 = vadd.f32 %v55, %v104
    %v129 = vadd.f32 %v56, %v105
    %v130 = vadd.f32 %v57, %v106
    %v131 = vadd.f32 %v58, %v107
    %v132 = vadd.f32 %v59, %v108
    %v133 = vadd.f32 %v60, %v109
    %v134 = vadd.f32 %v61, %v110
    %v135 = vadd.f32 %v62, %v111
    %v136 = vadd.f32 %v63, %v112
    %v137 = vadd.f32 %v64, %v113
    %v138 = vadd.f32 %v65, %v114
    %v139 = vadd.f32 %v66, %v115
    %v140 = vadd.f32 %v67, %v116
    %v141 = vadd.f32 %v68, %v117
    %v142 = vadd.f32 %v69, %v118
    %v143 = vadd.f32 %v70, %v119
    %s144 = scalar_lea.vmem [#allocation2], 32
    %v145 = vld [vmem:[%s144] sm:$0xff]
    %v146 = vld [vmem:[%s144 + $0x8] sm:$0xff]
    %v147 = vld [vmem:[%s144 + $0x10] sm:$0xff]
    %v148 = vld [vmem:[%s144 + $0x18] sm:$0xff]
    %v149 = vld [vmem:[%s144 + $0x20] sm:$0xff]
    %v150 = vld [vmem:[%s144 + $0x28] sm:$0xff]
    %v151 = vld [vmem:[%s144 + $0x30] sm:$0xff]
    %v152 = vld [vmem:[%s144 + $0x38] sm:$0xff]
    %v153 = vld [vmem:[%s144 + $0x40] sm:$0xff]
    %v154 = vld [vmem:[%s144 + $0x48] sm:$0xff]
    %v155 = vld [vmem:[%s144 + $0x50] sm:$0xff]
    %v156 = vld [vmem:[%s144 + $0x58] sm:$0xff]
    %v157 = vld [vmem:[%s144 + $0x60] sm:$0xff]
    %v158 = vld [vmem:[%s144 + $0x68] sm:$0xff]
    %v159 = vld [vmem:[%s144 + $0x70] sm:$0xff]
    %v160 = vld [vmem:[%s144 + $0x78] sm:$0xff]
    %v161 = vld [vmem:[%s144 + $0x80] sm:$0xff]
    %v162 = vld [vmem:[%s144 + $0x88] sm:$0xff]
    %v163 = vld [vmem:[%s144 + $0x90] sm:$0xff]
    %v164 = vld [vmem:[%s144 + $0x98] sm:$0xff]
    %v165 = vld [vmem:[%s144 + $0xa0] sm:$0xff]
    %v166 = vld [vmem:[%s144 + $0xa8] sm:$0xff]
    %v167 = vld [vmem:[%s144 + $0xb0] sm:$0xff]
    %v168 = vld [vmem:[%s144 + $0xb8] sm:$0xff]
    %v169 = vmul.f32 %v145, 0.30364123
    %v170 = vmul.f32 %v146, 0.30364123
    %v171 = vmul.f32 %v147, 0.30364123
    %v172 = vmul.f32 %v148, 0.30364123
    %v173 = vmul.f32 %v149, 0.30364123
    %v174 = vmul.f32 %v150, 0.30364123
    %v175 = vmul.f32 %v151, 0.30364123
    %v176 = vmul.f32 %v152, 0.30364123
    %v177 = vmul.f32 %v153, 0.30364123
    %v178 = vmul.f32 %v154, 0.30364123
    %v179 = vmul.f32 %v155, 0.30364123
    %v180 = vmul.f32 %v156, 0.30364123
    %v181 = vmul.f32 %v157, 0.30364123
    %v182 = vmul.f32 %v158, 0.30364123
    %v183 = vmul.f32 %v159, 0.30364123
    %v184 = vmul.f32 %v160, 0.30364123
    %v185 = vmul.f32 %v161, 0.30364123
    %v186 = vmul.f32 %v162, 0.30364123
    %v187 = vmul.f32 %v163, 0.30364123
    %v188 = vmul.f32 %v164, 0.30364123
    %v189 = vmul.f32 %v165, 0.30364123
    %v190 = vmul.f32 %v166, 0.30364123
    %v191 = vmul.f32 %v167, 0.30364123
    %v192 = vmul.f32 %v168, 0.30364123
    %v193 = vadd.f32 %v120, %v169
    %v194 = vadd.f32 %v121, %v170
    %v195 = vadd.f32 %v122, %v171
    %v196 = vadd.f32 %v123, %v172
    %v197 = vadd.f32 %v124, %v173
    %v198 = vadd.f32 %v125, %v174
    %v199 = vadd.f32 %v126, %v175
    %v200 = vadd.f32 %v127, %v176
    %v201 = vadd.f32 %v128, %v177
    %v202 = vadd.f32 %v129, %v178
    %v203 = vadd.f32 %v130, %v179
    %v204 = vadd.f32 %v131, %v180
    %v205 = vadd.f32 %v132, %v181
    %v206 = vadd.f32 %v133, %v182
    %v207 = vadd.f32 %v134, %v183
    %v208 = vadd.f32 %v135, %v184
    %v209 = vadd.f32 %v136, %v185
    %v210 = vadd.f32 %v137, %v186
    %v211 = vadd.f32 %v138, %v187
    %v212 = vadd.f32 %v139, %v188
    %v213 = vadd.f32 %v140, %v189
    %v214 = vadd.f32 %v141, %v190
    %v215 = vadd.f32 %v142, %v191
    %v216 = vadd.f32 %v143, %v192
    %s217 = scalar_lea.vmem [#allocation2], 48
    %v218 = vld [vmem:[%s217] sm:$0xff]
    %v219 = vld [vmem:[%s217 + $0x8] sm:$0xff]
    %v220 = vld [vmem:[%s217 + $0x10] sm:$0xff]
    %v221 = vld [vmem:[%s217 + $0x18] sm:$0xff]
    %v222 = vld [vmem:[%s217 + $0x20] sm:$0xff]
    %v223 = vld [vmem:[%s217 + $0x28] sm:$0xff]
    %v224 = vld [vmem:[%s217 + $0x30] sm:$0xff]
    %v225 = vld [vmem:[%s217 + $0x38] sm:$0xff]
    %v226 = vld [vmem:[%s217 + $0x40] sm:$0xff]
    %v227 = vld [vmem:[%s217 + $0x48] sm:$0xff]
    %v228 = vld [vmem:[%s217 + $0x50] sm:$0xff]
    %v229 = vld [vmem:[%s217 + $0x58] sm:$0xff]
    %v230 = vld [vmem:[%s217 + $0x60] sm:$0xff]
    %v231 = vld [vmem:[%s217 + $0x68] sm:$0xff]
    %v232 = vld [vmem:[%s217 + $0x70] sm:$0xff]
    %v233 = vld [vmem:[%s217 + $0x78] sm:$0xff]
    %v234 = vld [vmem:[%s217 + $0x80] sm:$0xff]
    %v235 = vld [vmem:[%s217 + $0x88] sm:$0xff]
    %v236 = vld [vmem:[%s217 + $0x90] sm:$0xff]
    %v237 = vld [vmem:[%s217 + $0x98] sm:$0xff]
    %v238 = vld [vmem:[%s217 + $0xa0] sm:$0xff]
    %v239 = vld [vmem:[%s217 + $0xa8] sm:$0xff]
    %v240 = vld [vmem:[%s217 + $0xb0] sm:$0xff]
    %v241 = vld [vmem:[%s217 + $0xb8] sm:$0xff]
    %v242 = vmul.f32 %v218, 0.23647602
    %v243 = vmul.f32 %v219, 0.23647602
    %v244 = vmul.f32 %v220, 0.23647602
    %v245 = vmul.f32 %v221, 0.23647602
    %v246 = vmul.f32 %v222, 0.23647602
    %v247 = vmul.f32 %v223, 0.23647602
    %v248 = vmul.f32 %v224, 0.23647602
    %v249 = vmul.f32 %v225, 0.23647602
    %v250 = vmul.f32 %v226, 0.23647602
    %v251 = vmul.f32 %v227, 0.23647602
    %v252 = vmul.f32 %v228, 0.23647602
    %v253 = vmul.f32 %v229, 0.23647602
    %v254 = vmul.f32 %v230, 0.23647602
    %v255 = vmul.f32 %v231, 0.23647602
    %v256 = vmul.f32 %v232, 0.23647602
    %v257 = vmul.f32 %v233, 0.23647602
    %v258 = vmul.f32 %v234, 0.23647602
    %v259 = vmul.f32 %v235, 0.23647602
    %v260 = vmul.f32 %v236, 0.23647602
    %v261 = vmul.f32 %v237, 0.23647602
    %v262 = vmul.f32 %v238, 0.23647602
    %v263 = vmul.f32 %v239, 0.23647602
    %v264 = vmul.f32 %v240, 0.23647602
    %v265 = vmul.f32 %v241, 0.23647602
    %v266 = vadd.f32 %v193, %v242
    %v267 = vadd.f32 %v194, %v243
    %v268 = vadd.f32 %v195, %v244
    %v269 = vadd.f32 %v196, %v245
    %v270 = vadd.f32 %v197, %v246
    %v271 = vadd.f32 %v198, %v247
    %v272 = vadd.f32 %v199, %v248
    %v273 = vadd.f32 %v200, %v249
    %v274 = vadd.f32 %v201, %v250
    %v275 = vadd.f32 %v202, %v251
    %v276 = vadd.f32 %v203, %v252
    %v277 = vadd.f32 %v204, %v253
    %v278 = vadd.f32 %v205, %v254
    %v279 = vadd.f32 %v206, %v255
    %v280 = vadd.f32 %v207, %v256
    %v281 = vadd.f32 %v208, %v257
    %v282 = vadd.f32 %v209, %v258
    %v283 = vadd.f32 %v210, %v259
    %v284 = vadd.f32 %v211, %v260
    %v285 = vadd.f32 %v212, %v261
    %v286 = vadd.f32 %v213, %v262
    %v287 = vadd.f32 %v214, %v263
    %v288 = vadd.f32 %v215, %v264
    %v289 = vadd.f32 %v216, %v265
    %s290 = scalar_lea.vmem [#allocation2], 64
    %v291 = vld [vmem:[%s290] sm:$0xff]
    %v292 = vld [vmem:[%s290 + $0x8] sm:$0xff]
    %v293 = vld [vmem:[%s290 + $0x10] sm:$0xff]
    %v294 = vld [vmem:[%s290 + $0x18] sm:$0xff]
    %v295 = vld [vmem:[%s290 + $0x20] sm:$0xff]
    %v296 = vld [vmem:[%s290 + $0x28] sm:$0xff]
    %v297 = vld [vmem:[%s290 + $0x30] sm:$0xff]
    %v298 = vld [vmem:[%s290 + $0x38] sm:$0xff]
    %v299 = vld [vmem:[%s290 + $0x40] sm:$0xff]
    %v300 = vld [vmem:[%s290 + $0x48] sm:$0xff]
    %v301 = vld [vmem:[%s290 + $0x50] sm:$0xff]
    %v302 = vld [vmem:[%s290 + $0x58] sm:$0xff]
    %v303 = vld [vmem:[%s290 + $0x60] sm:$0xff]
    %v304 = vld [vmem:[%s290 + $0x68] sm:$0xff]
    %v305 = vld [vmem:[%s290 + $0x70] sm:$0xff]
    %v306 = vld [vmem:[%s290 + $0x78] sm:$0xff]
    %v307 = vld [vmem:[%s290 + $0x80] sm:$0xff]
    %v308 = vld [vmem:[%s290 + $0x88] sm:$0xff]
    %v309 = vld [vmem:[%s290 + $0x90] sm:$0xff]
    %v310 = vld [vmem:[%s290 + $0x98] sm:$0xff]
    %v311 = vld [vmem:[%s290 + $0xa0] sm:$0xff]
    %v312 = vld [vmem:[%s290 + $0xa8] sm:$0xff]
    %v313 = vld [vmem:[%s290 + $0xb0] sm:$0xff]
    %v314 = vld [vmem:[%s290 + $0xb8] sm:$0xff]
    %v315 = vmul.f32 %v291, 0.111703366
    %v316 = vmul.f32 %v292, 0.111703366
    %v317 = vmul.f32 %v293, 0.111703366
    %v318 = vmul.f32 %v294, 0.111703366
    %v319 = vmul.f32 %v295, 0.111703366
    %v320 = vmul.f32 %v296, 0.111703366
    %v321 = vmul.f32 %v297, 0.111703366
    %v322 = vmul.f32 %v298, 0.111703366
    %v323 = vmul.f32 %v299, 0.111703366
    %v324 = vmul.f32 %v300, 0.111703366
    %v325 = vmul.f32 %v301, 0.111703366
    %v326 = vmul.f32 %v302, 0.111703366
    %v327 = vmul.f32 %v303, 0.111703366
    %v328 = vmul.f32 %v304, 0.111703366
    %v329 = vmul.f32 %v305, 0.111703366
    %v330 = vmul.f32 %v306, 0.111703366
    %v331 = vmul.f32 %v307, 0.111703366
    %v332 = vmul.f32 %v308, 0.111703366
    %v333 = vmul.f32 %v309, 0.111703366
    %v334 = vmul.f32 %v310, 0.111703366
    %v335 = vmul.f32 %v311, 0.111703366
    %v336 = vmul.f32 %v312, 0.111703366
    %v337 = vmul.f32 %v313, 0.111703366
    %v338 = vmul.f32 %v314, 0.111703366
    %v339 = vadd.f32 %v266, %v315
    %v340 = vadd.f32 %v267, %v316
    %v341 = vadd.f32 %v268, %v317
    %v342 = vadd.f32 %v269, %v318
    %v343 = vadd.f32 %v270, %v319
    %v344 = vadd.f32 %v271, %v320
    %v345 = vadd.f32 %v272, %v321
    %v346 = vadd.f32 %v273, %v322
    %v347 = vadd.f32 %v274, %v323
    %v348 = vadd.f32 %v275, %v324
    %v349 = vadd.f32 %v276, %v325
    %v350 = vadd.f32 %v277, %v326
    %v351 = vadd.f32 %v278, %v327
    %v352 = vadd.f32 %v279, %v328
    %v353 = vadd.f32 %v280, %v329
    %v354 = vadd.f32 %v281, %v330
    %v355 = vadd.f32 %v282, %v331
    %v356 = vadd.f32 %v283, %v332
    %v357 = vadd.f32 %v284, %v333
    %v358 = vadd.f32 %v285, %v334
    %v359 = vadd.f32 %v286, %v335
    %v360 = vadd.f32 %v287, %v336
    %v361 = vadd.f32 %v288, %v337
    %v362 = vadd.f32 %v289, %v338
    %v363 = vmul.f32 %v339, 0.111703366
    %v364 = vmul.f32 %v340, 0.111703366
    %v365 = vmul.f32 %v341, 0.111703366
    %v366 = vmul.f32 %v342, 0.111703366
    %v367 = vmul.f32 %v343, 0.111703366
    %v368 = vmul.f32 %v344, 0.111703366
    %v369 = vmul.f32 %v345, 0.111703366
    %v370 = vmul.f32 %v346, 0.111703366
    %v371 = vmul.f32 %v347, 0.111703366
    %v372 = vmul.f32 %v348, 0.111703366
    %v373 = vmul.f32 %v349, 0.111703366
    %v374 = vmul.f32 %v350, 0.111703366
    %v375 = vmul.f32 %v351, 0.111703366
    %v376 = vmul.f32 %v352, 0.111703366
    %v377 = vmul.f32 %v353, 0.111703366
    %v378 = vmul.f32 %v354, 0.111703366
    %v379 = vmul.f32 %v355, 0.111703366
    %v380 = vmul.f32 %v356, 0.111703366
    %v381 = vmul.f32 %v357, 0.111703366
    %v382 = vmul.f32 %v358, 0.111703366
    %v383 = vmul.f32 %v359, 0.111703366
    %v384 = vmul.f32 %v360, 0.111703366
    %v385 = vmul.f32 %v361, 0.111703366
    %v386 = vmul.f32 %v362, 0.111703366
    %v387 = vmul.f32 %v339, 0.23647602
    %v388 = vmul.f32 %v340, 0.23647602
    %v389 = vmul.f32 %v341, 0.23647602
    %v390 = vmul.f32 %v342, 0.23647602
    %v391 = vmul.f32 %v343, 0.23647602
    %v392 = vmul.f32 %v344, 0.23647602
    %v393 = vmul.f32 %v345, 0.23647602
    %v394 = vmul.f32 %v346, 0.23647602
    %v395 = vmul.f32 %v347, 0.23647602
    %v396 = vmul.f32 %v348, 0.23647602
    %v397 = vmul.f32 %v349, 0.23647602
    %v398 = vmul.f32 %v350, 0.23647602
    %v399 = vmul.f32 %v351, 0.23647602
    %v400 = vmul.f32 %v352, 0.23647602
    %v401 = vmul.f32 %v353, 0.23647602
    %v402 = vmul.f32 %v354, 0.23647602
    %v403 = vmul.f32 %v355, 0.23647602
    %v404 = vmul.f32 %v356, 0.23647602
    %v405 = vmul.f32 %v357, 0.23647602
    %v406 = vmul.f32 %v358, 0.23647602
    %v407 = vmul.f32 %v359, 0.23647602
    %v408 = vmul.f32 %v360, 0.23647602
    %v409 = vmul.f32 %v361, 0.23647602
    %v410 = vmul.f32 %v362, 0.23647602
    %vm435 = vcmask 1046528
    %v436 = vrot.slane %v387, 1
    %v437 = vrot.slane %v388, 1
    %v438 = vsel %vm435, %v436, %v437
    %v439 = vrot.slane %v389, 1
    %v440 = vrot.slane %v390, 1
    %v441 = vsel %vm435, %v439, %v440
    %v442 = vrot.slane %v391, 1
    %v443 = vrot.slane %v392, 1
    %v444 = vsel %vm435, %v442, %v443
    %v445 = vrot.slane %v393, 1
    %v446 = vrot.slane %v394, 1
    %v447 = vsel %vm435, %v445, %v446
    %v448 = vrot.slane %v395, 1
    %v449 = vrot.slane %v396, 1
    %v450 = vsel %vm435, %v448, %v449
    %v451 = vrot.slane %v397, 1
    %v452 = vrot.slane %v398, 1
    %v453 = vsel %vm435, %v451, %v452
    %v454 = vrot.slane %v399, 1
    %v455 = vrot.slane %v400, 1
    %v456 = vsel %vm435, %v454, %v455
    %v457 = vrot.slane %v401, 1
    %v458 = vrot.slane %v402, 1
    %v459 = vsel %vm435, %v457, %v458
    %v460 = vrot.slane %v403, 1
    %v461 = vrot.slane %v404, 1
    %v462 = vsel %vm435, %v460, %v461
    %v463 = vrot.slane %v405, 1
    %v464 = vrot.slane %v406, 1
    %v465 = vsel %vm435, %v463, %v464
    %v466 = vrot.slane %v407, 1
    %v467 = vrot.slane %v408, 1
    %v468 = vsel %vm435, %v466, %v467
    %v469 = vrot.slane %v409, 1
    %v470 = vrot.slane %v410, 1
    %v471 = vsel %vm435, %v469, %v470
    %v496 = vadd.f32 %v363, %v438
    %v497 = vadd.f32 %v364, %v437
    %v498 = vadd.f32 %v365, %v441
    %v499 = vadd.f32 %v366, %v440
    %v500 = vadd.f32 %v367, %v444
    %v501 = vadd.f32 %v368, %v443
    %v502 = vadd.f32 %v369, %v447
    %v503 = vadd.f32 %v370, %v446
    %v504 = vadd.f32 %v371, %v450
    %v505 = vadd.f32 %v372, %v449
    %v506 = vadd.f32 %v373, %v453
    %v507 = vadd.f32 %v374, %v452
    %v508 = vadd.f32 %v375, %v456
    %v509 = vadd.f32 %v376, %v455
    %v510 = vadd.f32 %v377, %v459
    %v511 = vadd.f32 %v378, %v458
    %v512 = vadd.f32 %v379, %v462
    %v513 = vadd.f32 %v380, %v461
    %v514 = vadd.f32 %v381, %v465
    %v515 = vadd.f32 %v382, %v464
    %v516 = vadd.f32 %v383, %v468
    %v517 = vadd.f32 %v384, %v467
    %v518 = vadd.f32 %v385, %v471
    %v519 = vadd.f32 %v386, %v470
    %v520 = vmul.f32 %v339, 0.30364123
    %v521 = vmul.f32 %v340, 0.30364123
    %v522 = vmul.f32 %v341, 0.30364123
    %v523 = vmul.f32 %v342, 0.30364123
    %v524 = vmul.f32 %v343, 0.30364123
    %v525 = vmul.f32 %v344, 0.30364123
    %v526 = vmul.f32 %v345, 0.30364123
    %v527 = vmul.f32 %v346, 0.30364123
    %v528 = vmul.f32 %v347, 0.30364123
    %v529 = vmul.f32 %v348, 0.30364123
    %v530 = vmul.f32 %v349, 0.30364123
    %v531 = vmul.f32 %v350, 0.30364123
    %v532 = vmul.f32 %v351, 0.30364123
    %v533 = vmul.f32 %v352, 0.30364123
    %v534 = vmul.f32 %v353, 0.30364123
    %v535 = vmul.f32 %v354, 0.30364123
    %v536 = vmul.f32 %v355, 0.30364123
    %v537 = vmul.f32 %v356, 0.30364123
    %v538 = vmul.f32 %v357, 0.30364123
    %v539 = vmul.f32 %v358, 0.30364123
    %v540 = vmul.f32 %v359, 0.30364123
    %v541 = vmul.f32 %v360, 0.30364123
    %v542 = vmul.f32 %v361, 0.30364123
    %v543 = vmul.f32 %v362, 0.30364123
    %vm568 = vcmask 1045504
    %v569 = vrot.slane %v520, 2
    %v570 = vrot.slane %v521, 2
    %v571 = vsel %vm568, %v569, %v570
    %v572 = vrot.slane %v522, 2
    %v573 = vrot.slane %v523, 2
    %v574 = vsel %vm568, %v572, %v573
    %v575 = vrot.slane %v524, 2
    %v576 = vrot.slane %v525, 2
    %v577 = vsel %vm568, %v575, %v576
    %v578 = vrot.slane %v526, 2
    %v579 = vrot.slane %v527, 2
    %v580 = vsel %vm568, %v578, %v579
    %v581 = vrot.slane %v528, 2
    %v582 = vrot.slane %v529, 2
    %v583 = vsel %vm568, %v581, %v582
    %v584 = vrot.slane %v530, 2
    %v585 = vrot.slane %v531, 2
    %v586 = vsel %vm568, %v584, %v585
    %v587 = vrot.slane %v532, 2
    %v588 = vrot.slane %v533, 2
    %v589 = vsel %vm568, %v587, %v588
    %v590 = vrot.slane %v534, 2
    %v591 = vrot.slane %v535, 2
    %v592 = vsel %vm568, %v590, %v591
    %v593 = vrot.slane %v536, 2
    %v594 = vrot.slane %v537, 2
    %v595 = vsel %vm568, %v593, %v594
    %v596 = vrot.slane %v538, 2
    %v597 = vrot.slane %v539, 2
    %v598 = vsel %vm568, %v596, %v597
    %v599 = vrot.slane %v540, 2
    %v600 = vrot.slane %v541, 2
    %v601 = vsel %vm568, %v599, %v600
    %v602 = vrot.slane %v542, 2
    %v603 = vrot.slane %v543, 2
    %v604 = vsel %vm568, %v602, %v603
    %v629 = vadd.f32 %v496, %v571
    %v630 = vadd.f32 %v497, %v570
    %v631 = vadd.f32 %v498, %v574
    %v632 = vadd.f32 %v499, %v573
    %v633 = vadd.f32 %v500, %v577
    %v634 = vadd.f32 %v501, %v576
    %v635 = vadd.f32 %v502, %v580
    %v636 = vadd.f32 %v503, %v579
    %v637 = vadd.f32 %v504, %v583
    %v638 = vadd.f32 %v505, %v582
    %v639 = vadd.f32 %v506, %v586
    %v640 = vadd.f32 %v507, %v585
    %v641 = vadd.f32 %v508, %v589
    %v642 = vadd.f32 %v509, %v588
    %v643 = vadd.f32 %v510, %v592
    %v644 = vadd.f32 %v511, %v591
    %v645 = vadd.f32 %v512, %v595
    %v646 = vadd.f32 %v513, %v594
    %v647 = vadd.f32 %v514, %v598
    %v648 = vadd.f32 %v515, %v597
    %v649 = vadd.f32 %v516, %v601
    %v650 = vadd.f32 %v517, %v600
    %v651 = vadd.f32 %v518, %v604
    %v652 = vadd.f32 %v519, %v603
    %vm653 = vcmask 1044480
    %v654 = vrot.slane %v387, 3
    %v655 = vrot.slane %v388, 3
    %v656 = vsel %vm653, %v654, %v655
    %v657 = vrot.slane %v389, 3
    %v658 = vrot.slane %v390, 3
    %v659 = vsel %vm653, %v657, %v658
    %v660 = vrot.slane %v391, 3
    %v661 = vrot.slane %v392, 3
    %v662 = vsel %vm653, %v660, %v661
    %v663 = vrot.slane %v393, 3
    %v664 = vrot.slane %v394, 3
    %v665 = vsel %vm653, %v663, %v664
    %v666 = vrot.slane %v395, 3
    %v667 = vrot.slane %v396, 3
    %v668 = vsel %vm653, %v666, %v667
    %v669 = vrot.slane %v397, 3
    %v670 = vrot.slane %v398, 3
    %v671 = vsel %vm653, %v669, %v670
    %v672 = vrot.slane %v399, 3
    %v673 = vrot.slane %v400, 3
    %v674 = vsel %vm653, %v672, %v673
    %v675 = vrot.slane %v401, 3
    %v676 = vrot.slane %v402, 3
    %v677 = vsel %vm653, %v675, %v676
    %v678 = vrot.slane %v403, 3
    %v679 = vrot.slane %v404, 3
    %v680 = vsel %vm653, %v678, %v679
    %v681 = vrot.slane %v405, 3
    %v682 = vrot.slane %v406, 3
    %v683 = vsel %vm653, %v681, %v682
    %v684 = vrot.slane %v407, 3
    %v685 = vrot.slane %v408, 3
    %v686 = vsel %vm653, %v684, %v685
    %v687 = vrot.slane %v409, 3
    %v688 = vrot.slane %v410, 3
    %v689 = vsel %vm653, %v687, %v688
    %v714 = vadd.f32 %v629, %v656
    %v715 = vadd.f32 %v630, %v655
    %v716 = vadd.f32 %v631, %v659
    %v717 = vadd.f32 %v632, %v658
    %v718 = vadd.f32 %v633, %v662
    %v719 = vadd.f32 %v634, %v661
    %v720 = vadd.f32 %v635, %v665
    %v721 = vadd.f32 %v636, %v664
    %v722 = vadd.f32 %v637, %v668
    %v723 = vadd.f32 %v638, %v667
    %v724 = vadd.f32 %v639, %v671
    %v725 = vadd.f32 %v640, %v670
    %v726 = vadd.f32 %v641, %v674
    %v727 = vadd.f32 %v642, %v673
    %v728 = vadd.f32 %v643, %v677
    %v729 = vadd.f32 %v644, %v676
    %v730 = vadd.f32 %v645, %v680
    %v731 = vadd.f32 %v646, %v679
    %v732 = vadd.f32 %v647, %v683
    %v733 = vadd.f32 %v648, %v682
    %v734 = vadd.f32 %v649, %v686
    %v735 = vadd.f32 %v650, %v685
    %v736 = vadd.f32 %v651, %v689
    %v737 = vadd.f32 %v652, %v688
    %vm762 = vcmask 1043456
    %v763 = vrot.slane %v363, 4
    %v764 = vrot.slane %v364, 4
    %v765 = vsel %vm762, %v763, %v764
    %v766 = vrot.slane %v365, 4
    %v767 = vrot.slane %v366, 4
    %v768 = vsel %vm762, %v766, %v767
    %v769 = vrot.slane %v367, 4
    %v770 = vrot.slane %v368, 4
    %v771 = vsel %vm762, %v769, %v770
    %v772 = vrot.slane %v369, 4
    %v773 = vrot.slane %v370, 4
    %v774 = vsel %vm762, %v772, %v773
    %v775 = vrot.slane %v371, 4
    %v776 = vrot.slane %v372, 4
    %v777 = vsel %vm762, %v775, %v776
    %v778 = vrot.slane %v373, 4
    %v779 = vrot.slane %v374, 4
    %v780 = vsel %vm762, %v778, %v779
    %v781 = vrot.slane %v375, 4
    %v782 = vrot.slane %v376, 4
    %v783 = vsel %vm762, %v781, %v782
    %v784 = vrot.slane %v377, 4
    %v785 = vrot.slane %v378, 4
    %v786 = vsel %vm762, %v784, %v785
    %v787 = vrot.slane %v379, 4
    %v788 = vrot.slane %v380, 4
    %v789 = vsel %vm762, %v787, %v788
    %v790 = vrot.slane %v381, 4
    %v791 = vrot.slane %v382, 4
    %v792 = vsel %vm762, %v790, %v791
    %v793 = vrot.slane %v383, 4
    %v794 = vrot.slane %v384, 4
    %v795 = vsel %vm762, %v793, %v794
    %v796 = vrot.slane %v385, 4
    %v797 = vrot.slane %v386, 4
    %v798 = vsel %vm762, %v796, %v797
    %v823 = vadd.f32 %v714, %v765
    %v824 = vadd.f32 %v715, %v764
    %v825 = vadd.f32 %v716, %v768
    %v826 = vadd.f32 %v717, %v767
    %v827 = vadd.f32 %v718, %v771
    %v828 = vadd.f32 %v719, %v770
    %v829 = vadd.f32 %v720, %v774
    %v830 = vadd.f32 %v721, %v773
    %v831 = vadd.f32 %v722, %v777
    %v832 = vadd.f32 %v723, %v776
    %v833 = vadd.f32 %v724, %v780
    %v834 = vadd.f32 %v725, %v779
    %v835 = vadd.f32 %v726, %v783
    %v836 = vadd.f32 %v727, %v782
    %v837 = vadd.f32 %v728, %v786
    %v838 = vadd.f32 %v729, %v785
    %v839 = vadd.f32 %v730, %v789
    %v840 = vadd.f32 %v731, %v788
    %v841 = vadd.f32 %v732, %v792
    %v842 = vadd.f32 %v733, %v791
    %v843 = vadd.f32 %v734, %v795
    %v844 = vadd.f32 %v735, %v794
    %v845 = vadd.f32 %v736, %v798
    %v846 = vadd.f32 %v737, %v797
    %847 = vst [vmem:[#allocation5] sm:$0xff] %v823
    %848 = vst [vmem:[#allocation5 + $0x8] sm:$0xf] %v824
    %849 = vst [vmem:[#allocation5 + $0x10] sm:$0xff] %v825
    %850 = vst [vmem:[#allocation5 + $0x18] sm:$0xf] %v826
    %851 = vst [vmem:[#allocation5 + $0x20] sm:$0xff] %v827
    %852 = vst [vmem:[#allocation5 + $0x28] sm:$0xf] %v828
    %853 = vst [vmem:[#allocation5 + $0x30] sm:$0xff] %v829
    %854 = vst [vmem:[#allocation5 + $0x38] sm:$0xf] %v830
    %855 = vst [vmem:[#allocation5 + $0x40] sm:$0xff] %v831
    %856 = vst [vmem:[#allocation5 + $0x48] sm:$0xf] %v832
    %857 = vst [vmem:[#allocation5 + $0x50] sm:$0xff] %v833
    %858 = vst [vmem:[#allocation5 + $0x58] sm:$0xf] %v834
    %859 = vst [vmem:[#allocation5 + $0x60] sm:$0xff] %v835
    %860 = vst [vmem:[#allocation5 + $0x68] sm:$0xf] %v836
    %861 = vst [vmem:[#allocation5 + $0x70] sm:$0xff] %v837
    %862 = vst [vmem:[#allocation5 + $0x78] sm:$0xf] %v838
    %863 = vst [vmem:[#allocation5 + $0x80] sm:$0xff] %v839
    %864 = vst [vmem:[#allocation5 + $0x88] sm:$0xf] %v840
    %865 = vst [vmem:[#allocation5 + $0x90] sm:$0xff] %v841
    %866 = vst [vmem:[#allocation5 + $0x98] sm:$0xf] %v842
    %867 = vst [vmem:[#allocation5 + $0xa0] sm:$0xff] %v843
    %868 = vst [vmem:[#allocation5 + $0xa8] sm:$0xf] %v844
    %869 = vst [vmem:[#allocation5 + $0xb0] sm:$0xff] %v845
    %870 = vst [vmem:[#allocation5 + $0xb8] sm:$0xf] %v846
    // Predicated region
    $region10: #{tpu_custom_call.1} parent=1 // pred_check
      _
    $region11: #{tpu_custom_call.1} parent=1 // pred_check_branch
      %872 = sbr.rel (0) target = $region13
    $region12: #{tpu_custom_call.1} parent=1 // pred_region
      %s874 = ssub.s32 3072, 3072
      %875 = vsyncadd [#allocation4], %s874
      %s876 = sshll.u32 [#allocation5], 4
      %s877 = int_to_ptr.vmem [resolvable:$true] %s876
      %882 = dma.vmem_to_hbm [thread:$0]  %s877, 3072, %s1, [#allocation4], 128, 128, 8
    $region13: #{tpu_custom_call.1} parent=1 // pred_fallthru
      _
    // Predicated region
    $region14: #{tpu_custom_call.1} parent=1 // pred_check
      _
    $region15: #{tpu_custom_call.1} parent=1 // pred_check_branch
      %884 = sbr.rel (0) target = $region17
    $region16: #{tpu_custom_call.1} parent=1 // pred_region
      %885 = dma.done [#allocation4], 3072
    $region17: #{tpu_custom_call.1} parent=1 // pred_fallthru
      _
    %886 = vsyncpa [#allocation3], 1
    %887 = vsyncpa [#allocation4], 1

</llo_original>
